<compile_context>
chip_gen: v7x
topology: tpu7x:2x2x1
jax: 0.10.0
libtpu: 0.0.40
codegen_flags: <defaults>
</compile_context>

<pallas_src>
import functools

import jax
import jax.numpy as jnp
from jax import lax
from jax.experimental import pallas as pl
from jax.experimental.pallas import tpu as pltpu

EPS = 1e-8  # PyTorch F.cosine_similarity default eps (per-norm clamp semantics)


def _vmem_capacity_bytes(default=64 * 1024 * 1024):
    """Physical VMEM per core; conservative (v7x) fallback if query unavailable."""
    try:
        cap = getattr(pltpu.get_tpu_info(), "vmem_capacity_bytes", None)
        if cap:
            return int(cap)
    except Exception:
        pass
    return default


def _tmg_inter_kernel(cls_ref, fake_ref, allk_ref, out_ref,
                      fake_hat_ref, acc_ref, *, num_classes, batch, tk, steps):
    """One grid step = one (TK, B, D) tile of classes for one core-split.

    cls_ref      : SMEM (1,) int32     -- current class index (scalar prefetch)
    fake_ref     : VMEM [B, D]         -- resident (constant block index)
    allk_ref     : VMEM [TK, B, D]     -- pipelined class tile
    out_ref      : VMEM (1, 1) f32     -- per-split inter-class similarity sum
    fake_hat_ref : VMEM [B, D]  f32    -- hoisted normalized fake features
    acc_ref      : VMEM (1, 1)  f32    -- running per-split accumulator
    """
    p = pl.program_id(0)          # parallel split (TensorCore on v7x)
    s = pl.program_id(1)          # step within this split
    cls = cls_ref[0]
    blk = p * steps + s           # global class-block index (may run past range)
    inv_batch = 1.0 / batch

    @pl.when(s == 0)
    def _init():
        fake = fake_ref[...].astype(jnp.float32)                         # [B, D]
        fake_sq = jnp.sum(fake * fake, axis=1, keepdims=True)            # [B, 1]
        fake_hat_ref[...] = fake * lax.rsqrt(jnp.maximum(fake_sq, EPS * EPS))
        acc_ref[...] = jnp.zeros_like(acc_ref)

    fake_hat = fake_hat_ref[...]                                         # [B, D]

    def body(j, partial):
        other = allk_ref[j].astype(jnp.float32)                          # [B, D]
        other_sq = jnp.sum(other * other, axis=1, keepdims=True)         # [B, 1]
        inv_other = lax.rsqrt(jnp.maximum(other_sq, EPS * EPS))          # [B, 1]
        cs = jnp.sum(fake_hat * other, axis=1, keepdims=True) * inv_other
        gclass = blk * tk + j
        # Explicit mask: skip the current class and any padded / out-of-range
        # class (duplicate tile from the clamped index_map, K % TK remainder).
        valid = jnp.logical_and(gclass < num_classes, gclass != cls)
        scale = jnp.where(valid, inv_batch, 0.0)
        return partial + jnp.sum(cs, axis=0, keepdims=True) * scale      # [1, 1]

    partial = lax.fori_loop(0, tk, body, jnp.zeros((1, 1), jnp.float32),
                            unroll=min(tk, 8))
    acc_ref[...] += partial

    @pl.when(s == steps - 1)
    def _finalize():
        out_ref[...] = acc_ref[...]


def tmg_cosine_loss(real_features, fake_features, all_classes_features, current_class):
    """Pallas wrapper reproducing TMGCosineLoss.forward.

    real_features:        [B, D] float32 (or bf16)
    fake_features:        [B, D] float32 (or bf16)
    all_classes_features: [K, B, D] float32 (or bf16)
    current_class:        python int / int32 scalar (module state in PyTorch)
    Returns: scalar float32 loss O_k = inter_sim - intra_sim.
    """
    num_classes, batch, feat_dim = all_classes_features.shape
    assert num_classes >= 2, "TMGCosineLoss divides by (num_classes - 1); need K >= 2"
    itemsize = jnp.dtype(all_classes_features.dtype).itemsize

    # ---- VMEM budget (per generation) and class-tile (TK) sizing -----------
    phys_vmem = _vmem_capacity_bytes()
    budget = (phys_vmem * 7) // 8                       # leave headroom
    vmem_limit = int(min(budget, 100 * 1024 * 1024))    # ~100 MiB cap on v5e/v6e, ~56 MiB on v7x

    padded_b = ((batch + 7) // 8) * 8                   # sublane padding
    padded_d = ((feat_dim + 127) // 128) * 128          # lane padding
    per_class_vmem = padded_b * padded_d * itemsize
    buffer_count = 2                                    # default double-buffering
    fixed_vmem = (2 * padded_b * padded_d * itemsize    # resident fake (buffered)
                  + padded_b * padded_d * 4             # fake_hat scratch (f32)
                  + (1 << 20))                          # slack
    avail = max(budget - fixed_vmem, per_class_vmem)
    target_tile = 2 * 1024 * 1024                       # ~1-4 MiB per class-tile buffer
    tk = int(max(1, min(num_classes,
                        target_tile // per_class_vmem,
                        avail // (buffer_count * per_class_vmem))))

    num_blocks = -(-num_classes // tk)
    splits = 2 if num_blocks >= 2 else 1                # v7x: one half of classes per TC
    steps = -(-num_blocks // splits)

    cls_arr = jnp.asarray([current_class], dtype=jnp.int32)
    kernel = functools.partial(_tmg_inter_kernel, num_classes=num_classes,
                               batch=batch, tk=tk, steps=steps)

    grid_spec = pltpu.PrefetchScalarGridSpec(
        num_scalar_prefetch=1,                          # current_class -> SMEM
        grid=(splits, steps),
        in_specs=[
            # fake: constant block index -> resident, no re-DMA per step.
            pl.BlockSpec((batch, feat_dim), lambda p, s, c: (0, 0)),
            # class tiles: TK classes per step, clamped so the DMA never reads
            # out of range (over-run blocks are fully masked in-kernel).
            pl.BlockSpec(
                (tk, batch, feat_dim),
                lambda p, s, c: (jnp.minimum(p * steps + s, num_blocks - 1), 0, 0)),
        ],
        out_specs=pl.BlockSpec((1, 1), lambda p, s, c: (p, 0)),
        scratch_shapes=[
            pltpu.VMEM((batch, feat_dim), jnp.float32),  # fake_hat (hoisted)
            pltpu.VMEM((1, 1), jnp.float32),             # per-split accumulator
        ],
    )

    cost = pl.CostEstimate(
        flops=int(5 * num_classes * batch * feat_dim + 3 * batch * feat_dim),
        transcendentals=int((num_classes + 1) * batch),
        bytes_accessed=int(num_classes * batch * feat_dim * itemsize
                           + batch * feat_dim * itemsize + splits * 4),
    )

    inter_parts = pl.pallas_call(
        kernel,
        out_shape=jax.ShapeDtypeStruct((splits, 1), jnp.float32),
        grid_spec=grid_spec,
        compiler_params=pltpu.CompilerParams(
            dimension_semantics=("parallel", "arbitrary"),
            vmem_limit_bytes=vmem_limit,
        ),
        cost_estimate=cost,
    )(cls_arr, fake_features, all_classes_features)

    inter_sim = jnp.sum(inter_parts) / (num_classes - 1)

    # Intra term is tiny ([B, D]); computed wrapper-side per the perf review so
    # real_features never occupies kernel VMEM.
    fake32 = fake_features.astype(jnp.float32)
    real32 = real_features.astype(jnp.float32)
    fn = jnp.maximum(jnp.sqrt(jnp.sum(fake32 * fake32, axis=1)), EPS)
    rn = jnp.maximum(jnp.sqrt(jnp.sum(real32 * real32, axis=1)), EPS)
    intra_sim = jnp.mean(jnp.sum(fake32 * real32, axis=1) / (fn * rn))

    return inter_sim - intra_sim


def _reference(real_features, fake_features, all_classes_features, current_class):
    """Pure-JAX reference mirroring the PyTorch forward."""
    def cos(a, b):
        an = jnp.maximum(jnp.linalg.norm(a, axis=1), EPS)
        bn = jnp.maximum(jnp.linalg.norm(b, axis=1), EPS)
        return jnp.sum(a * b, axis=1) / (an * bn)

    num_classes = all_classes_features.shape[0]
    intra = jnp.mean(cos(fake_features, real_features))
    inter = 0.0
    for k in range(num_classes):
        if k != current_class:
            inter += jnp.mean(cos(fake_features, all_classes_features[k]))
    inter = inter / (num_classes - 1)
    return inter - intra


if __name__ == "__main__":
    key = jax.random.PRNGKey(0)
    K, B, D = 4, 8, 32          # num_classes, batch_size, feat_dim
    current_class = 1           # NOTE: set externally in the PyTorch module

    k1, k2, k3 = jax.random.split(key, 3)
    real = jax.random.normal(k1, (B, D), dtype=jnp.float32)
    fake = jax.random.normal(k2, (B, D), dtype=jnp.float32)
    all_feats = jax.random.normal(k3, (K, B, D), dtype=jnp.float32)
    # make the "current class" slot consistent with real samples of that class
    all_feats = all_feats.at[current_class].set(real)

    loss = jax.block_until_ready(tmg_cosine_loss(real, fake, all_feats, current_class))
    ref = _reference(real, fake, all_feats, current_class)
    assert jnp.allclose(loss, ref, atol=1e-5, rtol=1e-5), (loss, ref)

    # bf16 HBM storage path (halves bytes read by this memory-bound kernel);
    # in-kernel math stays f32, so only input rounding differs.
    loss_bf16 = jax.block_until_ready(
        tmg_cosine_loss(real, fake.astype(jnp.bfloat16),
                        all_feats.astype(jnp.bfloat16), current_class))
    assert jnp.abs(loss_bf16 - ref) < 5e-2, (loss_bf16, ref)

    print("KERNEL_OK")
</pallas_src>

<mosaic_0001>
module attributes {stable_mosaic.version = 11 : i64} {
  func.func @_tmg_inter_kernel(%arg0: i32, %arg1: i32, %arg2: memref<1xi32, #tpu.memory_space<smem>>, %arg3: memref<8x32xf32, #tpu.memory_space<vmem>>, %arg4: memref<4x8x32xf32, #tpu.memory_space<vmem>>, %arg5: memref<1x1xf32, #tpu.memory_space<vmem>>, %arg6: memref<8x32xf32, #tpu.memory_space<vmem>>, %arg7: memref<1x1xf32, #tpu.memory_space<vmem>>) attributes {dimension_semantics = [#tpu.dimension_semantics<parallel>, #tpu.dimension_semantics<arbitrary>], iteration_bounds = array<i64: 1, 1>, scalar_prefetch = 1 : i64, scratch_operands = 2 : i64, tpu.core_type = #tpu.core_type<tc>, window_params = [{pipeline_mode = #tpu.pipeline_mode<synchronous>, transform_indices = @transform_0, window_bounds = array<i64: 8, 32>}, {transform_indices = @transform_1, window_bounds = array<i64: 4, 8, 32>}, {transform_indices = @transform_2, window_bounds = array<i64: 1, 1>}]} {
    %c0 = arith.constant 0 : index
    %0 = memref.load %arg2[%c0] : memref<1xi32, #tpu.memory_space<smem>>
    %c1_i32 = arith.constant 1 : i32
    %1 = arith.muli %arg0, %c1_i32 : i32
    %2 = arith.addi %1, %arg1 : i32
    %c0_i32 = arith.constant 0 : i32
    %3 = arith.cmpi eq, %arg1, %c0_i32 : i32
    %4 = arith.extui %3 : i1 to i32
    %c0_i32_0 = arith.constant 0 : i32
    %5 = arith.cmpi ne, %4, %c0_i32_0 : i32
    scf.if %5 {
      %c0_51 = arith.constant 0 : index
      %c0_52 = arith.constant 0 : index
      %110 = vector.load %arg3[%c0_51, %c0_52] : memref<8x32xf32, #tpu.memory_space<vmem>>, vector<8x32xf32>
      %111 = arith.mulf %110, %110 : vector<8x32xf32>
      %cst_53 = arith.constant dense<0.000000e+00> : vector<8xf32>
      %112 = vector.multi_reduction <add>, %111, %cst_53 [1] : vector<8x32xf32> to vector<8xf32>
      %113 = vector.shape_cast %112 : vector<8xf32> to vector<8x1xf32>
      %cst_54 = arith.constant 1.000000e-16 : f32
      %114 = vector.broadcast %cst_54 : f32 to vector<8x1xf32>
      %115 = arith.maximumf %113, %114 : vector<8x1xf32>
      %116 = math.rsqrt %115 : vector<8x1xf32>
      %117 = vector.broadcast %116 : vector<8x1xf32> to vector<8x32xf32>
      %118 = arith.mulf %110, %117 : vector<8x32xf32>
      %c0_55 = arith.constant 0 : index
      %c0_56 = arith.constant 0 : index
      %119 = vector.load %arg6[%c0_55, %c0_56] : memref<8x32xf32, #tpu.memory_space<vmem>>, vector<8x32xf32>
      tpu.vector_store %arg6[%c0_55, %c0_56], %118 {strides = array<i32>} : memref<8x32xf32, #tpu.memory_space<vmem>>, vector<8x32xf32>,
      %cst_57 = arith.constant 0.000000e+00 : f32
      %120 = vector.broadcast %cst_57 : f32 to vector<1x1xf32>
      %c0_58 = arith.constant 0 : index
      %c0_59 = arith.constant 0 : index
      %121 = vector.load %arg7[%c0_58, %c0_59] : memref<1x1xf32, #tpu.memory_space<vmem>>, vector<1x1xf32>
      tpu.vector_store %arg7[%c0_58, %c0_59], %120 {strides = array<i32>} : memref<1x1xf32, #tpu.memory_space<vmem>>, vector<1x1xf32>,
    } else {
    }
    %c0_1 = arith.constant 0 : index
    %c0_2 = arith.constant 0 : index
    %6 = vector.load %arg6[%c0_1, %c0_2] : memref<8x32xf32, #tpu.memory_space<vmem>>, vector<8x32xf32>
    %cst = arith.constant 0.000000e+00 : f32
    %7 = vector.broadcast %cst : f32 to vector<1x1xf32>
    %c0_i32_3 = arith.constant 0 : i32
    %8 = arith.index_cast %c0_i32_3 : i32 to index
    %c0_4 = arith.constant 0 : index
    %c0_5 = arith.constant 0 : index
    %9 = vector.load %arg4[%8, %c0_4, %c0_5] : memref<4x8x32xf32, #tpu.memory_space<vmem>>, vector<1x8x32xf32>
    %10 = vector.shape_cast %9 : vector<1x8x32xf32> to vector<8x32xf32>
    %11 = arith.mulf %10, %10 : vector<8x32xf32>
    %cst_6 = arith.constant dense<0.000000e+00> : vector<8xf32>
    %12 = vector.multi_reduction <add>, %11, %cst_6 [1] : vector<8x32xf32> to vector<8xf32>
    %13 = vector.shape_cast %12 : vector<8xf32> to vector<8x1xf32>
    %cst_7 = arith.constant 1.000000e-16 : f32
    %14 = vector.broadcast %cst_7 : f32 to vector<8x1xf32>
    %15 = arith.maximumf %13, %14 : vector<8x1xf32>
    %16 = math.rsqrt %15 : vector<8x1xf32>
    %17 = arith.mulf %6, %10 : vector<8x32xf32>
    %cst_8 = arith.constant dense<0.000000e+00> : vector<8xf32>
    %18 = vector.multi_reduction <add>, %17, %cst_8 [1] : vector<8x32xf32> to vector<8xf32>
    %19 = vector.shape_cast %18 : vector<8xf32> to vector<8x1xf32>
    %20 = arith.mulf %19, %16 : vector<8x1xf32>
    %c4_i32 = arith.constant 4 : i32
    %21 = arith.muli %2, %c4_i32 : i32
    %22 = arith.addi %21, %c0_i32_3 : i32
    %c4_i32_9 = arith.constant 4 : i32
    %23 = arith.cmpi slt, %22, %c4_i32_9 : i32
    %24 = arith.cmpi ne, %22, %0 : i32
    %25 = arith.andi %23, %24 : i1
    %cst_10 = arith.constant 1.250000e-01 : f32
    %cst_11 = arith.constant 0.000000e+00 : f32
    %26 = arith.select %25, %cst_10, %cst_11 : f32
    %cst_12 = arith.constant dense<0.000000e+00> : vector<1xf32>
    %27 = vector.multi_reduction <add>, %20, %cst_12 [0] : vector<8x1xf32> to vector<1xf32>
    %28 = vector.shape_cast %27 : vector<1xf32> to vector<1x1xf32>
    %29 = vector.broadcast %26 : f32 to vector<1x1xf32>
    %30 = arith.mulf %28, %29 : vector<1x1xf32>
    %31 = arith.addf %7, %30 : vector<1x1xf32>
    %c1_i32_13 = arith.constant 1 : i32
    %32 = arith.index_cast %c1_i32_13 : i32 to index
    %c0_14 = arith.constant 0 : index
    %c0_15 = arith.constant 0 : index
    %33 = vector.load %arg4[%32, %c0_14, %c0_15] : memref<4x8x32xf32, #tpu.memory_space<vmem>>, vector<1x8x32xf32>
    %34 = vector.shape_cast %33 : vector<1x8x32xf32> to vector<8x32xf32>
    %35 = arith.mulf %34, %34 : vector<8x32xf32>
    %cst_16 = arith.constant dense<0.000000e+00> : vector<8xf32>
    %36 = vector.multi_reduction <add>, %35, %cst_16 [1] : vector<8x32xf32> to vector<8xf32>
    %37 = vector.shape_cast %36 : vector<8xf32> to vector<8x1xf32>
    %cst_17 = arith.constant 1.000000e-16 : f32
    %38 = vector.broadcast %cst_17 : f32 to vector<8x1xf32>
    %39 = arith.maximumf %37, %38 : vector<8x1xf32>
    %40 = math.rsqrt %39 : vector<8x1xf32>
    %41 = arith.mulf %6, %34 : vector<8x32xf32>
    %cst_18 = arith.constant dense<0.000000e+00> : vector<8xf32>
    %42 = vector.multi_reduction <add>, %41, %cst_18 [1] : vector<8x32xf32> to vector<8xf32>
    %43 = vector.shape_cast %42 : vector<8xf32> to vector<8x1xf32>
    %44 = arith.mulf %43, %40 : vector<8x1xf32>
    %c4_i32_19 = arith.constant 4 : i32
    %45 = arith.muli %2, %c4_i32_19 : i32
    %46 = arith.addi %45, %c1_i32_13 : i32
    %c4_i32_20 = arith.constant 4 : i32
    %47 = arith.cmpi slt, %46, %c4_i32_20 : i32
    %48 = arith.cmpi ne, %46, %0 : i32
    %49 = arith.andi %47, %48 : i1
    %cst_21 = arith.constant 1.250000e-01 : f32
    %cst_22 = arith.constant 0.000000e+00 : f32
    %50 = arith.select %49, %cst_21, %cst_22 : f32
    %cst_23 = arith.constant dense<0.000000e+00> : vector<1xf32>
    %51 = vector.multi_reduction <add>, %44, %cst_23 [0] : vector<8x1xf32> to vector<1xf32>
    %52 = vector.shape_cast %51 : vector<1xf32> to vector<1x1xf32>
    %53 = vector.broadcast %50 : f32 to vector<1x1xf32>
    %54 = arith.mulf %52, %53 : vector<1x1xf32>
    %55 = arith.addf %31, %54 : vector<1x1xf32>
    %c2_i32 = arith.constant 2 : i32
    %56 = arith.index_cast %c2_i32 : i32 to index
    %c0_24 = arith.constant 0 : index
    %c0_25 = arith.constant 0 : index
    %57 = vector.load %arg4[%56, %c0_24, %c0_25] : memref<4x8x32xf32, #tpu.memory_space<vmem>>, vector<1x8x32xf32>
    %58 = vector.shape_cast %57 : vector<1x8x32xf32> to vector<8x32xf32>
    %59 = arith.mulf %58, %58 : vector<8x32xf32>
    %cst_26 = arith.constant dense<0.000000e+00> : vector<8xf32>
    %60 = vector.multi_reduction <add>, %59, %cst_26 [1] : vector<8x32xf32> to vector<8xf32>
    %61 = vector.shape_cast %60 : vector<8xf32> to vector<8x1xf32>
    %cst_27 = arith.constant 1.000000e-16 : f32
    %62 = vector.broadcast %cst_27 : f32 to vector<8x1xf32>
    %63 = arith.maximumf %61, %62 : vector<8x1xf32>
    %64 = math.rsqrt %63 : vector<8x1xf32>
    %65 = arith.mulf %6, %58 : vector<8x32xf32>
    %cst_28 = arith.constant dense<0.000000e+00> : vector<8xf32>
    %66 = vector.multi_reduction <add>, %65, %cst_28 [1] : vector<8x32xf32> to vector<8xf32>
    %67 = vector.shape_cast %66 : vector<8xf32> to vector<8x1xf32>
    %68 = arith.mulf %67, %64 : vector<8x1xf32>
    %c4_i32_29 = arith.constant 4 : i32
    %69 = arith.muli %2, %c4_i32_29 : i32
    %70 = arith.addi %69, %c2_i32 : i32
    %c4_i32_30 = arith.constant 4 : i32
    %71 = arith.cmpi slt, %70, %c4_i32_30 : i32
    %72 = arith.cmpi ne, %70, %0 : i32
    %73 = arith.andi %71, %72 : i1
    %cst_31 = arith.constant 1.250000e-01 : f32
    %cst_32 = arith.constant 0.000000e+00 : f32
    %74 = arith.select %73, %cst_31, %cst_32 : f32
    %cst_33 = arith.constant dense<0.000000e+00> : vector<1xf32>
    %75 = vector.multi_reduction <add>, %68, %cst_33 [0] : vector<8x1xf32> to vector<1xf32>
    %76 = vector.shape_cast %75 : vector<1xf32> to vector<1x1xf32>
    %77 = vector.broadcast %74 : f32 to vector<1x1xf32>
    %78 = arith.mulf %76, %77 : vector<1x1xf32>
    %79 = arith.addf %55, %78 : vector<1x1xf32>
    %c3_i32 = arith.constant 3 : i32
    %80 = arith.index_cast %c3_i32 : i32 to index
    %c0_34 = arith.constant 0 : index
    %c0_35 = arith.constant 0 : index
    %81 = vector.load %arg4[%80, %c0_34, %c0_35] : memref<4x8x32xf32, #tpu.memory_space<vmem>>, vector<1x8x32xf32>
    %82 = vector.shape_cast %81 : vector<1x8x32xf32> to vector<8x32xf32>
    %83 = arith.mulf %82, %82 : vector<8x32xf32>
    %cst_36 = arith.constant dense<0.000000e+00> : vector<8xf32>
    %84 = vector.multi_reduction <add>, %83, %cst_36 [1] : vector<8x32xf32> to vector<8xf32>
    %85 = vector.shape_cast %84 : vector<8xf32> to vector<8x1xf32>
    %cst_37 = arith.constant 1.000000e-16 : f32
    %86 = vector.broadcast %cst_37 : f32 to vector<8x1xf32>
    %87 = arith.maximumf %85, %86 : vector<8x1xf32>
    %88 = math.rsqrt %87 : vector<8x1xf32>
    %89 = arith.mulf %6, %82 : vector<8x32xf32>
    %cst_38 = arith.constant dense<0.000000e+00> : vector<8xf32>
    %90 = vector.multi_reduction <add>, %89, %cst_38 [1] : vector<8x32xf32> to vector<8xf32>
    %91 = vector.shape_cast %90 : vector<8xf32> to vector<8x1xf32>
    %92 = arith.mulf %91, %88 : vector<8x1xf32>
    %c4_i32_39 = arith.constant 4 : i32
    %93 = arith.muli %2, %c4_i32_39 : i32
    %94 = arith.addi %93, %c3_i32 : i32
    %c4_i32_40 = arith.constant 4 : i32
    %95 = arith.cmpi slt, %94, %c4_i32_40 : i32
    %96 = arith.cmpi ne, %94, %0 : i32
    %97 = arith.andi %95, %96 : i1
    %cst_41 = arith.constant 1.250000e-01 : f32
    %cst_42 = arith.constant 0.000000e+00 : f32
    %98 = arith.select %97, %cst_41, %cst_42 : f32
    %cst_43 = arith.constant dense<0.000000e+00> : vector<1xf32>
    %99 = vector.multi_reduction <add>, %92, %cst_43 [0] : vector<8x1xf32> to vector<1xf32>
    %100 = vector.shape_cast %99 : vector<1xf32> to vector<1x1xf32>
    %101 = vector.broadcast %98 : f32 to vector<1x1xf32>
    %102 = arith.mulf %100, %101 : vector<1x1xf32>
    %103 = arith.addf %79, %102 : vector<1x1xf32>
    %c4_i32_44 = arith.constant 4 : i32
    %c0_45 = arith.constant 0 : index
    %c0_46 = arith.constant 0 : index
    %104 = vector.load %arg7[%c0_45, %c0_46] : memref<1x1xf32, #tpu.memory_space<vmem>>, vector<1x1xf32>
    %105 = arith.addf %104, %103 : vector<1x1xf32>
    %c0_47 = arith.constant 0 : index
    %c0_48 = arith.constant 0 : index
    %106 = vector.load %arg7[%c0_47, %c0_48] : memref<1x1xf32, #tpu.memory_space<vmem>>, vector<1x1xf32>
    tpu.vector_store %arg7[%c0_47, %c0_48], %105 {strides = array<i32>} : memref<1x1xf32, #tpu.memory_space<vmem>>, vector<1x1xf32>,
    %c0_i32_49 = arith.constant 0 : i32
    %107 = arith.cmpi eq, %arg1, %c0_i32_49 : i32
    %108 = arith.extui %107 : i1 to i32
    %c0_i32_50 = arith.constant 0 : i32
    %109 = arith.cmpi ne, %108, %c0_i32_50 : i32
    scf.if %109 {
      %c0_51 = arith.constant 0 : index
      %c0_52 = arith.constant 0 : index
      %110 = vector.load %arg7[%c0_51, %c0_52] : memref<1x1xf32, #tpu.memory_space<vmem>>, vector<1x1xf32>
      %c0_53 = arith.constant 0 : index
      %c0_54 = arith.constant 0 : index
      %111 = vector.load %arg5[%c0_53, %c0_54] : memref<1x1xf32, #tpu.memory_space<vmem>>, vector<1x1xf32>
      tpu.vector_store %arg5[%c0_53, %c0_54], %110 {strides = array<i32>} : memref<1x1xf32, #tpu.memory_space<vmem>>, vector<1x1xf32>,
    } else {
    }
    return
  }
  func.func @transform_0(%arg0: i32, %arg1: i32, %arg2: memref<1xi32, #tpu.memory_space<smem>>) -> (i32, i32) {
    %c0_i32 = arith.constant 0 : i32
    %c0_i32_0 = arith.constant 0 : i32
    %c0_i32_1 = arith.constant 0 : i32
    return %c0_i32, %c0_i32_0 : i32, i32
  }
  func.func @transform_1(%arg0: i32, %arg1: i32, %arg2: memref<1xi32, #tpu.memory_space<smem>>) -> (i32, i32, i32) {
    %c1_i32 = arith.constant 1 : i32
    %0 = arith.muli %arg0, %c1_i32 : i32
    %1 = arith.addi %0, %arg1 : i32
    %c0_i32 = arith.constant 0 : i32
    %2 = arith.minsi %1, %c0_i32 : i32
    %c0_i32_0 = arith.constant 0 : i32
    %c0_i32_1 = arith.constant 0 : i32
    %c0_i32_2 = arith.constant 0 : i32
    return %2, %c0_i32_0, %c0_i32_1 : i32, i32, i32
  }
  func.func @transform_2(%arg0: i32, %arg1: i32, %arg2: memref<1xi32, #tpu.memory_space<smem>>) -> (i32, i32) {
    %c0_i32 = arith.constant 0 : i32
    %c0_i32_0 = arith.constant 0 : i32
    return %arg0, %c0_i32 : i32, i32
  }
}

</mosaic_0001>

<llo_original>
// kernel: tpu_custom_call.1
$region0: #{tpu_custom_call.1}
  #allocation0 [shape = 'u32[]', space=smem, size = 0x4, offset = 0x4, fixed_abs, tag = 'smem constant byte address 0x4 - core index']
  #allocation1 [shape = 'u32[144,128]{1,0:T(1,128)}', space=vmem, size = 0x12000, scoped, tag = 'internal scratch']
  #allocation2 [shape = 'f32[8,32]{1,0:T(8,128)}', space=vmem, size = 0x1000, scoped, tag = 'scratch operand']
  #allocation3 [shape = 'f32[1,1]{1,0:T(1,128)}', space=vmem, size = 0x200, scoped, tag = 'scratch operand']
  #allocation4 [shape = 's32[1]{0}', space=sflag, size = 0x4, scoped, tag = 'scoped memory for tpu_custom_call.1']
  #allocation5 [shape = 's32[1]{0:T(128)S(6)}', space=smem, size = 0x200, scoped, tag = 'prefetched SMEM operand 0']
  %s0 = inlined_call_operand.<no memory space> [shape: s32[1], index: 0, kind: input, shape index: {}]
  %s1 = inlined_call_operand.hbm [shape: f32[8,32], index: 1, kind: input, shape index: {}]
  %s2 = inlined_call_operand.hbm [shape: f32[4,8,32], index: 2, kind: input, shape index: {}]
  %s3 = inlined_call_operand.hbm [shape: f32[1,1], index: 3, kind: output, shape index: {}]
  %s4 = sld [smem:[#allocation0]]
  $region34: #{tpu_custom_call.1} parent=0
    _
  %s6 = ssub.s32 1, %s4
  %s7 = scalar_select 0, %s6, %s4
  %8 = sst [smem:[#allocation5]] %s0
  $region1: #{tpu_custom_call.1} parent=0
    #allocation6 [shape = 'u8[4096]{0}', space=vmem, size = 0x1000, scoped, tag = 'input window, operand 1, single buffered']
    #allocation7 [shape = 's32[1]{0}', space=sflag, size = 0x4, scoped, tag = 'scoped memory for tpu_custom_call.1']
    #allocation8 [shape = 's32[1]{0}', space=sflag, size = 0x4, scoped, tag = 'scoped memory for tpu_custom_call.1']
    #allocation9 [shape = 'u8[16384]{0}', space=vmem, size = 0x4000, scoped, tag = 'input window, operand 2, single buffered']
    #allocation10 [shape = 's32[1]{0}', space=sflag, size = 0x4, scoped, tag = 'scoped memory for tpu_custom_call.1']
    #allocation11 [shape = 'u8[512]{0}', space=vmem, size = 0x400, scoped, tag = 'output window, operand 0, single buffered']
    %9 = vsyncpa [#allocation7], 0
    %10 = vsyncpa [#allocation10], 0
    %11 = vsyncpa [#allocation8], 0
    // Predicated region
    $region2: #{tpu_custom_call.1} parent=1 // pred_check
      _
    $region3: #{tpu_custom_call.1} parent=1 // pred_check_branch
      %13 = sbr.rel (0) target = $region5
    $region4: #{tpu_custom_call.1} parent=1 // pred_region
      %s15 = ssub.s32 128, 128
      %16 = vsyncadd [#allocation7], %s15
      %s18 = sshll.u32 [#allocation6], 4
      %s19 = int_to_ptr.vmem [resolvable:$true] %s18
      %21 = dma.hbm_to_vmem [thread:$0]  %s1, 128, %s19, [#allocation7]
    $region5: #{tpu_custom_call.1} parent=1 // pred_fallthru
      _
    // Predicated region
    $region6: #{tpu_custom_call.1} parent=1 // pred_check
      _
    $region7: #{tpu_custom_call.1} parent=1 // pred_check_branch
      %23 = sbr.rel (0) target = $region9
    $region8: #{tpu_custom_call.1} parent=1 // pred_region
      %s24 = sadd.s32 0, 0
      %p25 = scmp.lt.s32.totalorder %s24, 0
      %s26 = scalar_select %p25, %s24, 0
      %s27 = smul.u32 4, %s26
      %s29 = ssub.s32 512, 512
      %30 = vsyncadd [#allocation10], %s29
      %s31 = smul.addr %s27, 128
      %s32 = scalar_lea.hbm %s2, %s31
      %s33 = sshll.u32 [#allocation9], 4
      %s34 = int_to_ptr.vmem [resolvable:$true] %s33
      %39 = dma.hbm_to_vmem [thread:$0]  %s32, 512, %s34, [#allocation10], 128, 128, 8
    $region9: #{tpu_custom_call.1} parent=1 // pred_fallthru
      _
    // Predicated region
    $region10: #{tpu_custom_call.1} parent=1 // pred_check
      _
    $region11: #{tpu_custom_call.1} parent=1 // pred_check_branch
      %41 = sbr.rel (0) target = $region13
    $region12: #{tpu_custom_call.1} parent=1 // pred_region
      %42 = dma.done [#allocation7], 128
    $region13: #{tpu_custom_call.1} parent=1 // pred_fallthru
      _
    // Predicated region
    $region14: #{tpu_custom_call.1} parent=1 // pred_check
      _
    $region15: #{tpu_custom_call.1} parent=1 // pred_check_branch
      %44 = sbr.rel (0) target = $region17
    $region16: #{tpu_custom_call.1} parent=1 // pred_region
      %45 = dma.done [#allocation10], 512
    $region17: #{tpu_custom_call.1} parent=1 // pred_fallthru
      _
    %s46 = sadd.s32 0, 0
    %p47 = scmp.lt.s32.totalorder %s46, 0
    %s48 = scalar_select %p47, %s46, 0
    %s49 = smul.u32 4, %s48
    %s50 = sld [smem:[#allocation5]]
    %s51 = sadd.s32 0, 0
    %p52 = scmp.eq.s32.totalorder 0, 0
    // Predicated region
    $region18: #{tpu_custom_call.1} parent=1 // pred_check
      %p53 = pneg %p52
    $region19: #{tpu_custom_call.1} parent=1 // pred_check_branch
      %55 = sbr.rel (%p53) target = $region21
    $region20: #{tpu_custom_call.1} parent=1 // pred_region
      %v56 = vld [vmem:[#allocation6] sm:$0xff]
      %v57 = vmul.f32 %v56, %v56
      %vm58 = vcmask 261120
      %v59 = vsel %vm58, %v57, 0.0
      %60 = vadd.xlane.f32.xlu0 %v59
      %v61 = vpop.xlane.xlu0 %60
      %v62 = vmax.f32 %v61, 1e-16
      %v63 = vrsqrt.pop %v62
      %v64 = vmul.f32 %v56, %v63
      %65 = vst.msk [vmem:[#allocation2] sm:$0xff] %vm58, %v64
      %vm66 = vcmask 0
      %67 = vst.msk [vmem:[#allocation3] sm:$0x1] %vm66, 0.0
    $region21: #{tpu_custom_call.1} parent=1 // pred_fallthru
      _
    %v68 = vld [vmem:[#allocation2] sm:$0xff]
    %v69 = vld [vmem:[#allocation9] sm:$0xff]
    %v70 = vmul.f32 %v69, %v69
    %vm71 = vcmask 261120
    %v72 = vsel %vm71, %v70, 0.0
    %73 = vadd.xlane.f32.xlu0 %v72
    %v74 = vpop.xlane.xlu0 %73
    %v75 = vmax.f32 %v74, 1e-16
    %v76 = vrsqrt.pop %v75
    %v77 = vmul.f32 %v68, %v69
    %v78 = vsel %vm71, %v77, 0.0
    %79 = vadd.xlane.f32.xlu0 %v78
    %v80 = vpop.xlane.xlu0 %79
    %v81 = vmul.f32 %v80, %v76
    %s82 = smul.u32 %s51, 4
    %p83 = scmp.lt.s32.totalorder %s82, 4
    %p84 = scmp.ne.s32.totalorder %s82, %s50
    %p85 = pnand %p83, %p84
    %p86 = pneg %p85
    %s87 = scalar_select %p86, 0.125, 0.0
    %v88 = vrot.slane %v81, 4
    %v89 = vadd.f32 %v81, %v88
    %v90 = vrot.slane %v89, 2
    %v91 = vadd.f32 %v89, %v90
    %v92 = vrot.slane %v91, 1
    %v93 = vadd.f32 %v91, %v92
    %v94 = vstv %s87
    %v95 = vmul.f32 %v93, %v94
    %v96 = vadd.f32 %v95, 0.0
    %s97 = scalar_lea.vmem [#allocation9], 8
    %v98 = vld [vmem:[%s97] sm:$0xff]
    %v99 = vmul.f32 %v98, %v98
    %v100 = vsel %vm71, %v99, 0.0
    %101 = vadd.xlane.f32.xlu0 %v100
    %v102 = vpop.xlane.xlu0 %101
    %v103 = vmax.f32 %v102, 1e-16
    %v104 = vrsqrt.pop %v103
    %v105 = vmul.f32 %v68, %v98
    %v106 = vsel %vm71, %v105, 0.0
    %107 = vadd.xlane.f32.xlu0 %v106
    %v108 = vpop.xlane.xlu0 %107
    %v109 = vmul.f32 %v108, %v104
    %s110 = sadd.s32 %s82, 1
    %p111 = scmp.lt.s32.totalorder %s110, 4
    %p112 = scmp.ne.s32.totalorder %s110, %s50
    %p113 = pnand %p111, %p112
    %p114 = pneg %p113
    %s115 = scalar_select %p114, 0.125, 0.0
    %v116 = vrot.slane %v109, 4
    %v117 = vadd.f32 %v109, %v116
    %v118 = vrot.slane %v117, 2
    %v119 = vadd.f32 %v117, %v118
    %v120 = vrot.slane %v119, 1
    %v121 = vadd.f32 %v119, %v120
    %v122 = vstv %s115
    %v123 = vmul.f32 %v121, %v122
    %v124 = vadd.f32 %v96, %v123
    %s125 = scalar_lea.vmem [#allocation9], 16
    %v126 = vld [vmem:[%s125] sm:$0xff]
    %v127 = vmul.f32 %v126, %v126
    %v128 = vsel %vm71, %v127, 0.0
    %129 = vadd.xlane.f32.xlu0 %v128
    %v130 = vpop.xlane.xlu0 %129
    %v131 = vmax.f32 %v130, 1e-16
    %v132 = vrsqrt.pop %v131
    %v133 = vmul.f32 %v68, %v126
    %v134 = vsel %vm71, %v133, 0.0
    %135 = vadd.xlane.f32.xlu0 %v134
    %v136 = vpop.xlane.xlu0 %135
    %v137 = vmul.f32 %v136, %v132
    %s138 = sadd.s32 %s82, 2
    %p139 = scmp.lt.s32.totalorder %s138, 4
    %p140 = scmp.ne.s32.totalorder %s138, %s50
    %p141 = pnand %p139, %p140
    %p142 = pneg %p141
    %s143 = scalar_select %p142, 0.125, 0.0
    %v144 = vrot.slane %v137, 4
    %v145 = vadd.f32 %v137, %v144
    %v146 = vrot.slane %v145, 2
    %v147 = vadd.f32 %v145, %v146
    %v148 = vrot.slane %v147, 1
    %v149 = vadd.f32 %v147, %v148
    %v150 = vstv %s143
    %v151 = vmul.f32 %v149, %v150
    %v152 = vadd.f32 %v124, %v151
    %s153 = scalar_lea.vmem [#allocation9], 24
    %v154 = vld [vmem:[%s153] sm:$0xff]
    %v155 = vmul.f32 %v154, %v154
    %v156 = vsel %vm71, %v155, 0.0
    %157 = vadd.xlane.f32.xlu0 %v156
    %v158 = vpop.xlane.xlu0 %157
    %v159 = vmax.f32 %v158, 1e-16
    %v160 = vrsqrt.pop %v159
    %v161 = vmul.f32 %v68, %v154
    %v162 = vsel %vm71, %v161, 0.0
    %163 = vadd.xlane.f32.xlu0 %v162
    %v164 = vpop.xlane.xlu0 %163
    %v165 = vmul.f32 %v164, %v160
    %s166 = sadd.s32 %s82, 3
    %p167 = scmp.lt.s32.totalorder %s166, 4
    %p168 = scmp.ne.s32.totalorder %s166, %s50
    %p169 = pnand %p167, %p168
    %p170 = pneg %p169
    %s171 = scalar_select %p170, 0.125, 0.0
    %v172 = vrot.slane %v165, 4
    %v173 = vadd.f32 %v165, %v172
    %v174 = vrot.slane %v173, 2
    %v175 = vadd.f32 %v173, %v174
    %v176 = vrot.slane %v175, 1
    %v177 = vadd.f32 %v175, %v176
    %v178 = vstv %s171
    %v179 = vmul.f32 %v177, %v178
    %v180 = vadd.f32 %v152, %v179
    %v181 = vld [vmem:[#allocation3] sm:$0x1]
    %v182 = vadd.f32 %v181, %v180
    %vm183 = vcmask 0
    %184 = vst.msk [vmem:[#allocation3] sm:$0x1] %vm183, %v182
    // Predicated region
    $region22: #{tpu_custom_call.1} parent=1 // pred_check
      %p185 = pneg %p52
    $region23: #{tpu_custom_call.1} parent=1 // pred_check_branch
      %187 = sbr.rel (%p185) target = $region25
    $region24: #{tpu_custom_call.1} parent=1 // pred_region
      %v188 = vld [vmem:[#allocation3] sm:$0x1]
      %189 = vst.msk [vmem:[#allocation11] sm:$0x1] %vm183, %v188
    $region25: #{tpu_custom_call.1} parent=1 // pred_fallthru
      _
    // Predicated region
    $region26: #{tpu_custom_call.1} parent=1 // pred_check
      _
    $region27: #{tpu_custom_call.1} parent=1 // pred_check_branch
      %191 = sbr.rel (0) target = $region29
    $region28: #{tpu_custom_call.1} parent=1 // pred_region
      %s193 = ssub.s32 16, 16
      %194 = vsyncadd [#allocation8], %s193
      %s196 = sshll.u32 [#allocation11], 4
      %s197 = int_to_ptr.vmem [resolvable:$true] %s196
      %199 = dma.vmem_to_hbm [thread:$0]  %s197, 16, %s3, [#allocation8]
    $region29: #{tpu_custom_call.1} parent=1 // pred_fallthru
      _
    // Predicated region
    $region30: #{tpu_custom_call.1} parent=1 // pred_check
      _
    $region31: #{tpu_custom_call.1} parent=1 // pred_check_branch
      %201 = sbr.rel (0) target = $region33
    $region32: #{tpu_custom_call.1} parent=1 // pred_region
      %202 = dma.done [#allocation8], 16
    $region33: #{tpu_custom_call.1} parent=1 // pred_fallthru
      _
    %203 = vsyncpa [#allocation7], 1
    %204 = vsyncpa [#allocation10], 1
    %205 = vsyncpa [#allocation8], 1

</llo_original>
